<compile_context>
chip_gen: v5e
topology: v5e:2x2
jax: 0.10.0
libtpu: 0.0.40
codegen_flags: <defaults>
</compile_context>

<pallas_src>
import functools

import jax
import jax.numpy as jnp
from jax.experimental import pallas as pl
from jax.experimental.pallas import tpu as pltpu


def fused_linear_kernel(x_ref, w_ref, b_ref, o_ref):
    # One batch tile per grid step: single MXU matmul with f32 accumulation and
    # a bias broadcast over sublanes. Weight/bias blocks use a constant
    # index_map, so they stay VMEM-resident across all grid steps.
    o_ref[...] = (
        jnp.dot(x_ref[...], w_ref[...], preferred_element_type=jnp.float32)
        + b_ref[...]
    ).astype(o_ref.dtype)


def init_params(key, in_f=10, out_f=10, n_layers=3, dtype=jnp.float32):
    """Deterministic PyTorch-Linear-style init: U(-1/sqrt(in), 1/sqrt(in))."""
    params = []
    bound = 1.0 / (in_f ** 0.5)
    for _ in range(n_layers):
        kw, kb, key = jax.random.split(key, 3)
        # PyTorch stores weight as (out_features, in_features)
        w = jax.random.uniform(kw, (out_f, in_f), dtype, minval=-bound, maxval=bound)
        b = jax.random.uniform(kb, (out_f,), dtype, minval=-bound, maxval=bound)
        params.append((w, b))
    return params


def fuse_params(params):
    """Collapse the 3 activation-free Linear layers into one affine map.

    PyTorch Linear computes h = x @ W.T + b with W stored (out, in), so
      h3 = x @ (W1.T @ W2.T @ W3.T) + ((b1 @ W2.T + b2) @ W3.T + b3).

    Call this ONCE at parameter-load time; pass the results to
    toy_model_forward so the hot path is a single Pallas custom call.
    """
    (w1, b1), (w2, b2), (w3, b3) = params
    w_fused = w1.T @ w2.T @ w3.T              # (in, out)
    b_fused = (b1 @ w2.T + b2) @ w3.T + b3    # (out,)
    return w_fused, b_fused.reshape(1, -1)    # bias as (1, out) for sublane broadcast


def _pick_batch_tile(batch, cap=1024):
    """Sublane-aligned (multiple of 8) batch tile.

    Small batch  -> one grid step (no per-step pipeline overhead, no pad for
                    8-aligned batches).
    Large batch  -> <= `cap`-row tiles, guaranteeing >= 2 grid steps so the
                    "parallel" grid axis spans both v7x TensorCores. A
                    (cap, 128-lane-padded) f32 tile is cap*128*4 B (~0.5 MiB at
                    cap=1024), comfortably double-buffered inside the default
                    scoped VMEM limit on v5e/v6e/v7x.
    """
    rounded = ((batch + 7) // 8) * 8
    return rounded if rounded <= cap else cap


@functools.partial(jax.jit, static_argnames=("tb",))
def toy_model_forward(x, w_fused, b_fused, *, tb=None):
    """Forward pass of ToyModel via a batch-tiled Pallas kernel.

    x:        (B, 10) activations.
    w_fused:  (10, 10) pre-fused weight  (from fuse_params, computed once).
    b_fused:  (1, 10)  pre-fused bias.
    tb:       optional batch tile override (multiple of 8).
    """
    B, f_in = x.shape
    f_out = w_fused.shape[1]

    if tb is None:
        tb = _pick_batch_tile(B)

    n_tiles = pl.cdiv(B, tb)
    b_pad = n_tiles * tb
    if b_pad != B:
        # Only triggers for batches not divisible by the chosen tile.
        x = jnp.pad(x, ((0, b_pad - B), (0, 0)))

    out = pl.pallas_call(
        fused_linear_kernel,
        out_shape=jax.ShapeDtypeStruct((b_pad, f_out), x.dtype),
        grid_spec=pltpu.PrefetchScalarGridSpec(
            num_scalar_prefetch=0,
            grid=(n_tiles,),
            in_specs=[
                pl.BlockSpec((tb, f_in), lambda i: (i, 0)),     # x: tiled over batch
                pl.BlockSpec((f_in, f_out), lambda i: (0, 0)),  # fused W: VMEM-resident
                pl.BlockSpec((1, f_out), lambda i: (0, 0)),     # fused b: VMEM-resident
            ],
            out_specs=pl.BlockSpec((tb, f_out), lambda i: (i, 0)),
        ),
        compiler_params=pltpu.CompilerParams(
            # Batch tiles are independent -> megacore sharding on v7x (2 TCs),
            # harmless no-op on v5e/v6e.
            dimension_semantics=("parallel",),
        ),
    )(x, w_fused, b_fused)

    return out[:B] if b_pad != B else out


def toy_model_ref(x, params):
    """Pure-JAX chained reference, matching the PyTorch module layer by layer."""
    h = x
    for w, b in params:
        h = h @ w.T + b
    return h


if __name__ == "__main__":
    key = jax.random.PRNGKey(0)
    kx, kp = jax.random.split(key)

    B, F = 32, 10  # Linear(10, 10) implies 10 features; small batch
    x = jax.random.normal(kx, (B, F), jnp.float32)
    params = init_params(kp)

    # Fusion happens once, outside the hot path.
    w_fused, b_fused = fuse_params(params)

    out = toy_model_forward(x, w_fused, b_fused)   # tb auto -> 32, grid=(1,)
    out = jax.block_until_ready(out)

    ref = toy_model_ref(x, params)
    assert out.shape == (B, F)
    # Fusion reorders f32 rounding slightly vs. the chained reference.
    assert jnp.allclose(out, ref, atol=5e-5, rtol=1e-5), "mismatch vs reference"

    print("KERNEL_OK")
</pallas_src>

<mosaic_0001>
module attributes {stable_mosaic.version = 11 : i64} {
  func.func @fused_linear_kernel(%arg0: i32, %arg1: memref<32x10xf32, #tpu.memory_space<vmem>>, %arg2: memref<10x10xf32, #tpu.memory_space<vmem>>, %arg3: memref<1x10xf32, #tpu.memory_space<vmem>>, %arg4: memref<32x10xf32, #tpu.memory_space<vmem>>) attributes {dimension_semantics = [#tpu.dimension_semantics<parallel>], iteration_bounds = array<i64: 1>, scalar_prefetch = 0 : i64, scratch_operands = 0 : i64, tpu.core_type = #tpu.core_type<tc>, window_params = [{transform_indices = @transform_0, window_bounds = array<i64: 32, 10>}, {pipeline_mode = #tpu.pipeline_mode<synchronous>, transform_indices = @transform_1, window_bounds = array<i64: 10, 10>}, {pipeline_mode = #tpu.pipeline_mode<synchronous>, transform_indices = @transform_2, window_bounds = array<i64: 1, 10>}, {transform_indices = @transform_3, window_bounds = array<i64: 32, 10>}]} {
    %c0 = arith.constant 0 : index
    %c0_0 = arith.constant 0 : index
    %0 = vector.load %arg1[%c0, %c0_0] : memref<32x10xf32, #tpu.memory_space<vmem>>, vector<32x10xf32>
    %c0_1 = arith.constant 0 : index
    %c0_2 = arith.constant 0 : index
    %1 = vector.load %arg2[%c0_1, %c0_2] : memref<10x10xf32, #tpu.memory_space<vmem>>, vector<10x10xf32>
    %cst = arith.constant dense<0.000000e+00> : vector<32x10xf32>
    %2 = tpu.matmul %0, %1, %cst {dimension_numbers = #tpu.dot_dimension_numbers<[1], [0], [0], [1], [0, 0, 1, 1], [], []>} : vector<32x10xf32>, vector<10x10xf32>, vector<32x10xf32> -> vector<32x10xf32>
    %c0_3 = arith.constant 0 : index
    %c0_4 = arith.constant 0 : index
    %3 = vector.load %arg3[%c0_3, %c0_4] : memref<1x10xf32, #tpu.memory_space<vmem>>, vector<1x10xf32>
    %4 = vector.broadcast %3 : vector<1x10xf32> to vector<32x10xf32>
    %5 = arith.addf %2, %4 : vector<32x10xf32>
    %c0_5 = arith.constant 0 : index
    %c0_6 = arith.constant 0 : index
    %6 = vector.load %arg4[%c0_5, %c0_6] : memref<32x10xf32, #tpu.memory_space<vmem>>, vector<32x10xf32>
    tpu.vector_store %arg4[%c0_5, %c0_6], %5 {strides = array<i32>} : memref<32x10xf32, #tpu.memory_space<vmem>>, vector<32x10xf32>,
    return
  }
  func.func @transform_0(%arg0: i32) -> (i32, i32) {
    %c0_i32 = arith.constant 0 : i32
    %c0_i32_0 = arith.constant 0 : i32
    return %arg0, %c0_i32 : i32, i32
  }
  func.func @transform_1(%arg0: i32) -> (i32, i32) {
    %c0_i32 = arith.constant 0 : i32
    %c0_i32_0 = arith.constant 0 : i32
    %c0_i32_1 = arith.constant 0 : i32
    return %c0_i32, %c0_i32_0 : i32, i32
  }
  func.func @transform_2(%arg0: i32) -> (i32, i32) {
    %c0_i32 = arith.constant 0 : i32
    %c0_i32_0 = arith.constant 0 : i32
    %c0_i32_1 = arith.constant 0 : i32
    return %c0_i32, %c0_i32_0 : i32, i32
  }
  func.func @transform_3(%arg0: i32) -> (i32, i32) {
    %c0_i32 = arith.constant 0 : i32
    %c0_i32_0 = arith.constant 0 : i32
    return %arg0, %c0_i32 : i32, i32
  }
}

</mosaic_0001>

<llo_original>
// kernel: toy_model_forward.1
$region0: #{toy_model_forward.1}
  #allocation0 [shape = 'u32[]', space=smem, size = 0x4, offset = 0x4, fixed_abs, tag = 'smem constant byte address 0x4 - core index']
  #allocation1 [shape = 'u32[72,128]{1,0:T(1,128)}', space=vmem, size = 0x9000, scoped, tag = 'internal scratch']
  %s0 = inlined_call_operand.vmem [shape: f32[32,10], index: 0, kind: input, shape index: {}]
  %s1 = inlined_call_operand.vmem [shape: f32[10,10], index: 1, kind: input, shape index: {}]
  %s2 = inlined_call_operand.vmem [shape: f32[1,10], index: 2, kind: input, shape index: {}]
  %s3 = inlined_call_operand.vmem [shape: f32[32,10], index: 3, kind: output, shape index: {}]
  %s4 = sld [smem:[#allocation0]]
  $region22: #{toy_model_forward.1} parent=0
    _
  %s6 = ssub.s32 1, %s4
  %s7 = scalar_select 0, %s6, %s4
  // Predicated region
  $region2: #{toy_model_forward.1} parent=0 // pred_check
    _
  $region3: #{toy_model_forward.1} parent=0 // pred_check_branch
    %9 = sbr.rel (0) target = $region5
  $region4: #{toy_model_forward.1} parent=0 // pred_region
    _
  $region5: #{toy_model_forward.1} parent=0 // pred_fallthru
    _
  // Predicated region
  $region6: #{toy_model_forward.1} parent=0 // pred_check
    _
  $region7: #{toy_model_forward.1} parent=0 // pred_check_branch
    %11 = sbr.rel (0) target = $region9
  $region8: #{toy_model_forward.1} parent=0 // pred_region
    _
  $region9: #{toy_model_forward.1} parent=0 // pred_fallthru
    _
  // Predicated region
  $region10: #{toy_model_forward.1} parent=0 // pred_check
    _
  $region11: #{toy_model_forward.1} parent=0 // pred_check_branch
    %13 = sbr.rel (0) target = $region13
  $region12: #{toy_model_forward.1} parent=0 // pred_region
    _
  $region13: #{toy_model_forward.1} parent=0 // pred_fallthru
    _
  %v14 = vld [vmem:[%s0] sm:$0xff]
  %v15 = vld [vmem:[%s0 + $0x8] sm:$0xff]
  %v16 = vld [vmem:[%s0 + $0x10] sm:$0xff]
  %v17 = vld [vmem:[%s0 + $0x18] sm:$0xff]
  %v18 = vld [vmem:[%s1] sm:$0xff]
  %v19 = vld [vmem:[%s1 + $0x8] sm:$0x3]
  %v20 = vld [vmem:[%s2] sm:$0x1]
  %v22 = vperm.slane %v20, 0
  %vm24 = vcmask 80896
  %v26 = vsel %vm24, %v14, 0
  %v29 = vsel %vm24, %v15, 0
  %v32 = vsel %vm24, %v16, 0
  %v35 = vsel %vm24, %v17, 0
  %vm37 = vcmask 1041408
  %v39 = vsel %vm37, %v19, 0
  %41 = vmatpush.msra.mxu0 0.0
  %42 = vmatpush.msra.mxu0 0.0
  %43 = vmatpush.msra.mxu0 0.0
  %44 = vmatpush.msra.mxu0 0.0
  %45 = vmatpush.msra.mxu0 0.0
  %46 = vmatpush.msra.mxu0 0.0
  %47 = vmatpush.msra.mxu0 0.0
  %48 = vmatpush.msra.mxu0 0.0
  %49 = vmatpush.msra.mxu0 0.0
  %50 = vmatpush.msra.mxu0 0.0
  %51 = vmatpush.msra.mxu0 0.0
  %52 = vmatpush.msra.mxu0 0.0
  %53 = vmatpush.msra.mxu0 0.0
  %54 = vmatpush.msra.mxu0 0.0
  %55 = vmatpush.msra.mxu0 %v39
  %56 = vmatpush.msra.mxu0 %v18
  %57 = vmatmul.f32.gmra.mxu0 %v26
  %v58 = vpop.f32.mrf.mxu0
  %v59 = vadd.f32 %v22, %v58
  %60 = vmatmul.f32.gmra.mxu0 %v29
  %v61 = vpop.f32.mrf.mxu0
  %v62 = vadd.f32 %v22, %v61
  %63 = vmatmul.f32.gmra.mxu0 %v32
  %v64 = vpop.f32.mrf.mxu0
  %v65 = vadd.f32 %v22, %v64
  %66 = vmatmul.f32.gmra.mxu0 %v35
  %v67 = vpop.f32.mrf.mxu0
  %v68 = vadd.f32 %v22, %v67
  %69 = vdwg.mxu0
  %70 = vst.msk [vmem:[%s3] sm:$0xff] %vm24, %v59
  %71 = vst.msk [vmem:[%s3 + $0x8] sm:$0xff] %vm24, %v62
  %72 = vst.msk [vmem:[%s3 + $0x10] sm:$0xff] %vm24, %v65
  %73 = vst.msk [vmem:[%s3 + $0x18] sm:$0xff] %vm24, %v68
  // Predicated region
  $region14: #{toy_model_forward.1} parent=0 // pred_check
    _
  $region15: #{toy_model_forward.1} parent=0 // pred_check_branch
    %75 = sbr.rel (0) target = $region17
  $region16: #{toy_model_forward.1} parent=0 // pred_region
    _
  $region17: #{toy_model_forward.1} parent=0 // pred_fallthru
    _
  // Predicated region
  $region18: #{toy_model_forward.1} parent=0 // pred_check
    _
  $region19: #{toy_model_forward.1} parent=0 // pred_check_branch
    %77 = sbr.rel (0) target = $region21
  $region20: #{toy_model_forward.1} parent=0 // pred_region
    _
  $region21: #{toy_model_forward.1} parent=0 // pred_fallthru
    _

</llo_original>
